<compile_context>
chip_gen: v7x
topology: tpu7x:2x2x1
jax: 0.10.0
libtpu: 0.0.40
codegen_flags: <defaults>
</compile_context>

<pallas_src>
import functools

import numpy as np
import jax
import jax.numpy as jnp
from jax.experimental import pallas as pl
from jax.experimental.pallas import tpu as pltpu

EPS = 1e-7                 # chronologer constants.epsilon
FDR = 0.001                # hard-coded in Spectrum_masked_negLogit.forward
EULER_GAMMA = 0.5772156649015329


def _spectrum_masked_neglogit_kernel(pred_ref, true_ref, out_ref,
                                     sp_ref, st_ref, spt_ref,
                                     *, eps, fdr, batch):
    step = pl.program_id(0)

    @pl.when(step == 0)
    def _init():
        sp_ref[...] = jnp.zeros_like(sp_ref)
        st_ref[...] = jnp.zeros_like(st_ref)
        spt_ref[...] = jnp.zeros_like(spt_ref)

    pred = pred_ref[...]                       # (B, tile_n) f32
    true = true_ref[...]

    # ion mask + masking (divisor is per-element, so it cannot be hoisted to a
    # per-row reciprocal without changing semantics).  Zero-padded columns give
    # pm = tm = 0, so they contribute nothing to the accumulators.
    t1 = true + 1.0
    ion_mask = t1 / (t1 + eps)
    pm = pred * ion_mask
    tm = true * ion_mask

    # fused per-row partial reductions: |pm|^2, |tm|^2, <pm, tm>  -> (B, 1) each
    sp_ref[...] += jnp.sum(pm * pm, axis=-1, keepdims=True)
    st_ref[...] += jnp.sum(tm * tm, axis=-1, keepdims=True)
    spt_ref[...] += jnp.sum(pm * tm, axis=-1, keepdims=True)

    @pl.when(step == pl.num_programs(0) - 1)
    def _finalize():
        # product == sum(l2_norm(pm) * l2_norm(tm)) ; only B exact divides remain
        denom = (jnp.sqrt(jnp.maximum(sp_ref[...], eps))
                 * jnp.sqrt(jnp.maximum(st_ref[...], eps)))
        product = spt_ref[...] / denom                                       # (B, 1)

        # neg_logit
        score = (jnp.log(jnp.maximum(1.0 - product, eps))
                 - jnp.log(jnp.maximum(product, eps)))                       # (B, 1)

        # Gumbel fit (method of moments, unbiased std) + ppf(1 - fdr)
        mean = jnp.sum(score, axis=0, keepdims=True) * (1.0 / batch)         # (1, 1)
        var = jnp.sum((score - mean) ** 2, axis=0, keepdims=True) * (1.0 / (batch - 1))
        beta = jnp.sqrt(var) * float(np.sqrt(6.0) / np.pi)
        mu = mean - EULER_GAMMA * beta
        threshold = mu - beta * float(np.log(-np.log(1.0 - fdr)))            # (1, 1)

        # fdr-masked mean: single fused pass (mask, masked sum, count together)
        keep = score < threshold                                             # (B, 1)
        num = jnp.sum(jnp.where(keep, score, 0.0), axis=0, keepdims=True) + eps
        den = jnp.sum(jnp.where(keep, 1.0, 0.0), axis=0, keepdims=True) + eps
        out_ref[...] = (num / den).astype(out_ref.dtype)                     # (1, 1)


@functools.partial(jax.jit, static_argnames=("eps", "fdr"))
def spectrum_masked_neglogit(pred, true, weights=None, eps=EPS, fdr=FDR):
    """Pallas forward pass of Spectrum_masked_negLogit (`weights` is unused, as in torch)."""
    del weights                                # the torch forward never uses it
    if pred.shape != true.shape:
        raise ValueError("pred/true shape mismatch")
    b = pred.shape[0]
    if b < 2:
        raise ValueError("need at least 2 spectra to fit the Gumbel outlier model")

    # dims (1, -1) of the torch code -> a single lane-axis reduce per batch row
    pred2 = pred.reshape(b, -1).astype(jnp.float32)
    true2 = true.reshape(b, -1).astype(jnp.float32)
    n = pred2.shape[1]

    # Lane-dense tile width: multiple of 128, capped so one (B, tile_n) f32
    # block stays ~2 MiB (leaves room for 2 inputs x double buffering in VMEM).
    n128 = -(-n // 128) * 128
    cap = max(128, ((2 * 1024 * 1024) // (4 * b)) // 128 * 128)
    tile_n = min(n128, cap)
    n_pad = -(-n128 // tile_n) * tile_n
    if n_pad != n:
        pred2 = jnp.pad(pred2, ((0, 0), (0, n_pad - n)))
        true2 = jnp.pad(true2, ((0, 0), (0, n_pad - n)))
    grid = (n_pad // tile_n,)

    kernel = functools.partial(_spectrum_masked_neglogit_kernel,
                               eps=float(eps), fdr=float(fdr), batch=b)
    out = pl.pallas_call(
        kernel,
        out_shape=jax.ShapeDtypeStruct((1, 1), jnp.float32),
        grid_spec=pltpu.PrefetchScalarGridSpec(
            num_scalar_prefetch=0,
            grid=grid,
            in_specs=[pl.BlockSpec((b, tile_n), lambda i: (0, i)),
                      pl.BlockSpec((b, tile_n), lambda i: (0, i))],
            out_specs=pl.BlockSpec((1, 1), lambda i: (0, 0)),
            scratch_shapes=[pltpu.VMEM((b, 1), jnp.float32),
                            pltpu.VMEM((b, 1), jnp.float32),
                            pltpu.VMEM((b, 1), jnp.float32)]),
        compiler_params=pltpu.CompilerParams(
            dimension_semantics=("arbitrary",),
            vmem_limit_bytes=32 * 1024 * 1024),
    )(pred2, true2)
    return out[0, 0]


def _reference_numpy(pred, true, eps=EPS, fdr=FDR):
    """float64 NumPy mirror of the torch module (normalize-then-sum order)."""
    pred = np.asarray(pred, np.float64)
    true = np.asarray(true, np.float64)
    ion_mask = (true + 1.0) / (true + 1.0 + eps)
    pm = pred * ion_mask
    tm = true * ion_mask

    def l2n(v):
        ss = np.sum(v * v, axis=(1, -1), keepdims=True)
        return v / np.sqrt(np.maximum(ss, eps))

    product = np.sum(l2n(pm) * l2n(tm), axis=(1, -1))
    score = np.log(np.maximum(1.0 - product, eps)) - np.log(np.maximum(product, eps))
    beta = np.std(score, ddof=1) * np.sqrt(6.0) / np.pi
    mu = np.mean(score) - np.euler_gamma * beta
    threshold = mu - beta * np.log(-np.log(1.0 - fdr))
    mask = (score < threshold).astype(np.float64)
    return (np.sum(score * mask) + eps) / (np.sum(mask) + eps)


if __name__ == "__main__":
    key = jax.random.PRNGKey(0)
    B, C, L = 8, 4, 32                          # (batch, ion channels, sequence)
    k1, k2, k3, k4 = jax.random.split(key, 4)

    true = jax.random.uniform(k1, (B, C, L), jnp.float32)           # intensities
    pad = jax.random.uniform(k2, (B, C, L)) < 0.25                   # absent ions
    true = jnp.where(pad, -1.0, true)                                # marked with -1
    pred = jnp.clip(0.7 * true
                    + 0.3 * jax.random.uniform(k3, (B, C, L), jnp.float32)
                    + 0.05 * jax.random.normal(k4, (B, C, L), jnp.float32),
                    0.0, None)
    weights = jnp.ones((B, C, L), jnp.float32)                       # unused by forward

    out = jax.block_until_ready(spectrum_masked_neglogit(pred, true, weights))
    ref = _reference_numpy(pred, true)

    assert np.allclose(float(out), ref, rtol=2e-4, atol=2e-4), (float(out), ref)
    print("KERNEL_OK")
</pallas_src>

<mosaic_0001>
module attributes {stable_mosaic.version = 11 : i64} {
  func.func @_spectrum_masked_neglogit_kernel(%arg0: i32, %arg1: memref<8x128xf32, #tpu.memory_space<vmem>>, %arg2: memref<8x128xf32, #tpu.memory_space<vmem>>, %arg3: memref<1x1xf32, #tpu.memory_space<vmem>>, %arg4: memref<8x1xf32, #tpu.memory_space<vmem>>, %arg5: memref<8x1xf32, #tpu.memory_space<vmem>>, %arg6: memref<8x1xf32, #tpu.memory_space<vmem>>) attributes {dimension_semantics = [#tpu.dimension_semantics<arbitrary>], iteration_bounds = array<i64: 1>, scalar_prefetch = 0 : i64, scratch_operands = 3 : i64, tpu.core_type = #tpu.core_type<tc>, window_params = [{transform_indices = @transform_0, window_bounds = array<i64: 8, 128>}, {transform_indices = @transform_1, window_bounds = array<i64: 8, 128>}, {pipeline_mode = #tpu.pipeline_mode<synchronous>, transform_indices = @transform_2, window_bounds = array<i64: 1, 1>}]} {
    %c0_i32 = arith.constant 0 : i32
    %0 = arith.cmpi eq, %arg0, %c0_i32 : i32
    %1 = arith.extui %0 : i1 to i32
    %c0_i32_0 = arith.constant 0 : i32
    %2 = arith.cmpi ne, %1, %c0_i32_0 : i32
    scf.if %2 {
      %cst_22 = arith.constant 0.000000e+00 : f32
      %33 = vector.broadcast %cst_22 : f32 to vector<8x1xf32>
      %c0_23 = arith.constant 0 : index
      %c0_24 = arith.constant 0 : index
      %34 = vector.load %arg4[%c0_23, %c0_24] : memref<8x1xf32, #tpu.memory_space<vmem>>, vector<8x1xf32>
      tpu.vector_store %arg4[%c0_23, %c0_24], %33 {strides = array<i32>} : memref<8x1xf32, #tpu.memory_space<vmem>>, vector<8x1xf32>,
      %cst_25 = arith.constant 0.000000e+00 : f32
      %35 = vector.broadcast %cst_25 : f32 to vector<8x1xf32>
      %c0_26 = arith.constant 0 : index
      %c0_27 = arith.constant 0 : index
      %36 = vector.load %arg5[%c0_26, %c0_27] : memref<8x1xf32, #tpu.memory_space<vmem>>, vector<8x1xf32>
      tpu.vector_store %arg5[%c0_26, %c0_27], %35 {strides = array<i32>} : memref<8x1xf32, #tpu.memory_space<vmem>>, vector<8x1xf32>,
      %cst_28 = arith.constant 0.000000e+00 : f32
      %37 = vector.broadcast %cst_28 : f32 to vector<8x1xf32>
      %c0_29 = arith.constant 0 : index
      %c0_30 = arith.constant 0 : index
      %38 = vector.load %arg6[%c0_29, %c0_30] : memref<8x1xf32, #tpu.memory_space<vmem>>, vector<8x1xf32>
      tpu.vector_store %arg6[%c0_29, %c0_30], %37 {strides = array<i32>} : memref<8x1xf32, #tpu.memory_space<vmem>>, vector<8x1xf32>,
    } else {
    }
    %c0 = arith.constant 0 : index
    %c0_1 = arith.constant 0 : index
    %3 = vector.load %arg1[%c0, %c0_1] : memref<8x128xf32, #tpu.memory_space<vmem>>, vector<8x128xf32>
    %c0_2 = arith.constant 0 : index
    %c0_3 = arith.constant 0 : index
    %4 = vector.load %arg2[%c0_2, %c0_3] : memref<8x128xf32, #tpu.memory_space<vmem>>, vector<8x128xf32>
    %cst = arith.constant 1.000000e+00 : f32
    %5 = vector.broadcast %cst : f32 to vector<8x128xf32>
    %6 = arith.addf %4, %5 : vector<8x128xf32>
    %cst_4 = arith.constant 1.000000e-07 : f32
    %7 = vector.broadcast %cst_4 : f32 to vector<8x128xf32>
    %8 = arith.addf %6, %7 : vector<8x128xf32>
    %9 = arith.divf %6, %8 : vector<8x128xf32>
    %10 = arith.mulf %3, %9 : vector<8x128xf32>
    %11 = arith.mulf %4, %9 : vector<8x128xf32>
    %c0_5 = arith.constant 0 : index
    %c0_6 = arith.constant 0 : index
    %12 = vector.load %arg4[%c0_5, %c0_6] : memref<8x1xf32, #tpu.memory_space<vmem>>, vector<8x1xf32>
    %13 = arith.mulf %10, %10 : vector<8x128xf32>
    %cst_7 = arith.constant dense<0.000000e+00> : vector<8xf32>
    %14 = vector.multi_reduction <add>, %13, %cst_7 [1] : vector<8x128xf32> to vector<8xf32>
    %15 = vector.shape_cast %14 : vector<8xf32> to vector<8x1xf32>
    %16 = arith.addf %12, %15 : vector<8x1xf32>
    %c0_8 = arith.constant 0 : index
    %c0_9 = arith.constant 0 : index
    %17 = vector.load %arg4[%c0_8, %c0_9] : memref<8x1xf32, #tpu.memory_space<vmem>>, vector<8x1xf32>
    tpu.vector_store %arg4[%c0_8, %c0_9], %16 {strides = array<i32>} : memref<8x1xf32, #tpu.memory_space<vmem>>, vector<8x1xf32>,
    %c0_10 = arith.constant 0 : index
    %c0_11 = arith.constant 0 : index
    %18 = vector.load %arg5[%c0_10, %c0_11] : memref<8x1xf32, #tpu.memory_space<vmem>>, vector<8x1xf32>
    %19 = arith.mulf %11, %11 : vector<8x128xf32>
    %cst_12 = arith.constant dense<0.000000e+00> : vector<8xf32>
    %20 = vector.multi_reduction <add>, %19, %cst_12 [1] : vector<8x128xf32> to vector<8xf32>
    %21 = vector.shape_cast %20 : vector<8xf32> to vector<8x1xf32>
    %22 = arith.addf %18, %21 : vector<8x1xf32>
    %c0_13 = arith.constant 0 : index
    %c0_14 = arith.constant 0 : index
    %23 = vector.load %arg5[%c0_13, %c0_14] : memref<8x1xf32, #tpu.memory_space<vmem>>, vector<8x1xf32>
    tpu.vector_store %arg5[%c0_13, %c0_14], %22 {strides = array<i32>} : memref<8x1xf32, #tpu.memory_space<vmem>>, vector<8x1xf32>,
    %c0_15 = arith.constant 0 : index
    %c0_16 = arith.constant 0 : index
    %24 = vector.load %arg6[%c0_15, %c0_16] : memref<8x1xf32, #tpu.memory_space<vmem>>, vector<8x1xf32>
    %25 = arith.mulf %10, %11 : vector<8x128xf32>
    %cst_17 = arith.constant dense<0.000000e+00> : vector<8xf32>
    %26 = vector.multi_reduction <add>, %25, %cst_17 [1] : vector<8x128xf32> to vector<8xf32>
    %27 = vector.shape_cast %26 : vector<8xf32> to vector<8x1xf32>
    %28 = arith.addf %24, %27 : vector<8x1xf32>
    %c0_18 = arith.constant 0 : index
    %c0_19 = arith.constant 0 : index
    %29 = vector.load %arg6[%c0_18, %c0_19] : memref<8x1xf32, #tpu.memory_space<vmem>>, vector<8x1xf32>
    tpu.vector_store %arg6[%c0_18, %c0_19], %28 {strides = array<i32>} : memref<8x1xf32, #tpu.memory_space<vmem>>, vector<8x1xf32>,
    %c0_i32_20 = arith.constant 0 : i32
    %30 = arith.cmpi eq, %arg0, %c0_i32_20 : i32
    %31 = arith.extui %30 : i1 to i32
    %c0_i32_21 = arith.constant 0 : i32
    %32 = arith.cmpi ne, %31, %c0_i32_21 : i32
    scf.if %32 {
      %c0_22 = arith.constant 0 : index
      %c0_23 = arith.constant 0 : index
      %33 = vector.load %arg4[%c0_22, %c0_23] : memref<8x1xf32, #tpu.memory_space<vmem>>, vector<8x1xf32>
      %cst_24 = arith.constant 1.000000e-07 : f32
      %34 = vector.broadcast %cst_24 : f32 to vector<8x1xf32>
      %35 = arith.maximumf %33, %34 : vector<8x1xf32>
      %36 = math.sqrt %35 : vector<8x1xf32>
      %c0_25 = arith.constant 0 : index
      %c0_26 = arith.constant 0 : index
      %37 = vector.load %arg5[%c0_25, %c0_26] : memref<8x1xf32, #tpu.memory_space<vmem>>, vector<8x1xf32>
      %cst_27 = arith.constant 1.000000e-07 : f32
      %38 = vector.broadcast %cst_27 : f32 to vector<8x1xf32>
      %39 = arith.maximumf %37, %38 : vector<8x1xf32>
      %40 = math.sqrt %39 : vector<8x1xf32>
      %41 = arith.mulf %36, %40 : vector<8x1xf32>
      %c0_28 = arith.constant 0 : index
      %c0_29 = arith.constant 0 : index
      %42 = vector.load %arg6[%c0_28, %c0_29] : memref<8x1xf32, #tpu.memory_space<vmem>>, vector<8x1xf32>
      %43 = arith.divf %42, %41 : vector<8x1xf32>
      %cst_30 = arith.constant 1.000000e+00 : f32
      %44 = vector.broadcast %cst_30 : f32 to vector<8x1xf32>
      %45 = arith.subf %44, %43 : vector<8x1xf32>
      %cst_31 = arith.constant 1.000000e-07 : f32
      %46 = vector.broadcast %cst_31 : f32 to vector<8x1xf32>
      %47 = arith.maximumf %45, %46 : vector<8x1xf32>
      %48 = math.log %47 : vector<8x1xf32>
      %cst_32 = arith.constant 1.000000e-07 : f32
      %49 = vector.broadcast %cst_32 : f32 to vector<8x1xf32>
      %50 = arith.maximumf %43, %49 : vector<8x1xf32>
      %51 = math.log %50 : vector<8x1xf32>
      %52 = arith.subf %48, %51 : vector<8x1xf32>
      %cst_33 = arith.constant dense<0.000000e+00> : vector<1xf32>
      %53 = vector.multi_reduction <add>, %52, %cst_33 [0] : vector<8x1xf32> to vector<1xf32>
      %54 = vector.shape_cast %53 : vector<1xf32> to vector<1x1xf32>
      %cst_34 = arith.constant 1.250000e-01 : f32
      %55 = vector.broadcast %cst_34 : f32 to vector<1x1xf32>
      %56 = arith.mulf %54, %55 : vector<1x1xf32>
      %57 = vector.broadcast %56 : vector<1x1xf32> to vector<8x1xf32>
      %58 = arith.subf %52, %57 : vector<8x1xf32>
      %59 = arith.mulf %58, %58 : vector<8x1xf32>
      %cst_35 = arith.constant dense<0.000000e+00> : vector<1xf32>
      %60 = vector.multi_reduction <add>, %59, %cst_35 [0] : vector<8x1xf32> to vector<1xf32>
      %61 = vector.shape_cast %60 : vector<1xf32> to vector<1x1xf32>
      %cst_36 = arith.constant 0.142857149 : f32
      %62 = vector.broadcast %cst_36 : f32 to vector<1x1xf32>
      %63 = arith.mulf %61, %62 : vector<1x1xf32>
      %64 = math.sqrt %63 : vector<1x1xf32>
      %cst_37 = arith.constant 0.779696822 : f32
      %65 = vector.broadcast %cst_37 : f32 to vector<1x1xf32>
      %66 = arith.mulf %64, %65 : vector<1x1xf32>
      %cst_38 = arith.constant 0.577215672 : f32
      %67 = vector.broadcast %cst_38 : f32 to vector<1x1xf32>
      %68 = arith.mulf %67, %66 : vector<1x1xf32>
      %69 = arith.subf %56, %68 : vector<1x1xf32>
      %cst_39 = arith.constant -6.90725517 : f32
      %70 = vector.broadcast %cst_39 : f32 to vector<1x1xf32>
      %71 = arith.mulf %66, %70 : vector<1x1xf32>
      %72 = arith.subf %69, %71 : vector<1x1xf32>
      %73 = vector.broadcast %72 : vector<1x1xf32> to vector<8x1xf32>
      %74 = arith.cmpf olt, %52, %73 : vector<8x1xf32>
      %cst_40 = arith.constant 0.000000e+00 : f32
      %75 = vector.broadcast %cst_40 : f32 to vector<8x1xf32>
      %76 = arith.select %74, %52, %75 : vector<8x1xi1>, vector<8x1xf32>
      %cst_41 = arith.constant dense<0.000000e+00> : vector<1xf32>
      %77 = vector.multi_reduction <add>, %76, %cst_41 [0] : vector<8x1xf32> to vector<1xf32>
      %78 = vector.shape_cast %77 : vector<1xf32> to vector<1x1xf32>
      %cst_42 = arith.constant 1.000000e-07 : f32
      %79 = vector.broadcast %cst_42 : f32 to vector<1x1xf32>
      %80 = arith.addf %78, %79 : vector<1x1xf32>
      %cst_43 = arith.constant 1.000000e+00 : f32
      %cst_44 = arith.constant 0.000000e+00 : f32
      %81 = vector.broadcast %cst_43 : f32 to vector<8x1xf32>
      %82 = vector.broadcast %cst_44 : f32 to vector<8x1xf32>
      %83 = arith.select %74, %81, %82 : vector<8x1xi1>, vector<8x1xf32>
      %cst_45 = arith.constant dense<0.000000e+00> : vector<1xf32>
      %84 = vector.multi_reduction <add>, %83, %cst_45 [0] : vector<8x1xf32> to vector<1xf32>
      %85 = vector.shape_cast %84 : vector<1xf32> to vector<1x1xf32>
      %cst_46 = arith.constant 1.000000e-07 : f32
      %86 = vector.broadcast %cst_46 : f32 to vector<1x1xf32>
      %87 = arith.addf %85, %86 : vector<1x1xf32>
      %88 = arith.divf %80, %87 : vector<1x1xf32>
      %c0_47 = arith.constant 0 : index
      %c0_48 = arith.constant 0 : index
      %89 = vector.load %arg3[%c0_47, %c0_48] : memref<1x1xf32, #tpu.memory_space<vmem>>, vector<1x1xf32>
      tpu.vector_store %arg3[%c0_47, %c0_48], %88 {strides = array<i32>} : memref<1x1xf32, #tpu.memory_space<vmem>>, vector<1x1xf32>,
    } else {
    }
    return
  }
  func.func @transform_0(%arg0: i32) -> (i32, i32) {
    %c0_i32 = arith.constant 0 : i32
    %c0_i32_0 = arith.constant 0 : i32
    return %c0_i32, %arg0 : i32, i32
  }
  func.func @transform_1(%arg0: i32) -> (i32, i32) {
    %c0_i32 = arith.constant 0 : i32
    %c0_i32_0 = arith.constant 0 : i32
    return %c0_i32, %arg0 : i32, i32
  }
  func.func @transform_2(%arg0: i32) -> (i32, i32) {
    %c0_i32 = arith.constant 0 : i32
    %c0_i32_0 = arith.constant 0 : i32
    %c0_i32_1 = arith.constant 0 : i32
    return %c0_i32, %c0_i32_0 : i32, i32
  }
}

</mosaic_0001>

<llo_original>
// kernel: spectrum_masked_neglogit.1
$region0: #{spectrum_masked_neglogit.1}
  #allocation0 [shape = 'u32[]', space=smem, size = 0x4, offset = 0x4, fixed_abs, tag = 'smem constant byte address 0x4 - core index']
  #allocation1 [shape = 'u32[144,128]{1,0:T(1,128)}', space=vmem, size = 0x12000, scoped, tag = 'internal scratch']
  #allocation2 [shape = 'f32[8,1]{1,0:T(8,128)}', space=vmem, size = 0x1000, scoped, tag = 'scratch operand']
  #allocation3 [shape = 'f32[8,1]{1,0:T(8,128)}', space=vmem, size = 0x1000, scoped, tag = 'scratch operand']
  #allocation4 [shape = 'f32[8,1]{1,0:T(8,128)}', space=vmem, size = 0x1000, scoped, tag = 'scratch operand']
  %s0 = inlined_call_operand.vmem [shape: f32[8,128], index: 0, kind: input, shape index: {}]
  %s1 = inlined_call_operand.vmem [shape: f32[8,128], index: 1, kind: input, shape index: {}]
  %s2 = inlined_call_operand.hbm [shape: f32[1,1], index: 2, kind: output, shape index: {}]
  %s3 = sld [smem:[#allocation0]]
  $region26: #{spectrum_masked_neglogit.1} parent=0
    _
  %s5 = ssub.s32 1, %s3
  %s6 = scalar_select 0, %s5, %s3
  $region1: #{spectrum_masked_neglogit.1} parent=0
    #allocation5 [shape = 'u8[512]{0}', space=vmem, size = 0x400, scoped, tag = 'output window, operand 0, single buffered']
    #allocation6 [shape = 's32[1]{0}', space=sflag, size = 0x4, scoped, tag = 'scoped memory for spectrum_masked_neglogit.1']
    %7 = vsyncpa [#allocation6], 0
    // Predicated region
    $region2: #{spectrum_masked_neglogit.1} parent=1 // pred_check
      _
    $region3: #{spectrum_masked_neglogit.1} parent=1 // pred_check_branch
      %9 = sbr.rel (0) target = $region5
    $region4: #{spectrum_masked_neglogit.1} parent=1 // pred_region
      _
    $region5: #{spectrum_masked_neglogit.1} parent=1 // pred_fallthru
      _
    // Predicated region
    $region6: #{spectrum_masked_neglogit.1} parent=1 // pred_check
      _
    $region7: #{spectrum_masked_neglogit.1} parent=1 // pred_check_branch
      %11 = sbr.rel (0) target = $region9
    $region8: #{spectrum_masked_neglogit.1} parent=1 // pred_region
      _
    $region9: #{spectrum_masked_neglogit.1} parent=1 // pred_fallthru
      _
    %p12 = scmp.eq.s32.totalorder 0, 0
    // Predicated region
    $region10: #{spectrum_masked_neglogit.1} parent=1 // pred_check
      %p13 = pneg %p12
    $region11: #{spectrum_masked_neglogit.1} parent=1 // pred_check_branch
      %15 = sbr.rel (%p13) target = $region13
    $region12: #{spectrum_masked_neglogit.1} parent=1 // pred_region
      %vm16 = vcmask 7168
      %17 = vst.msk [vmem:[#allocation2] sm:$0xff] %vm16, 0.0
      %18 = vst.msk [vmem:[#allocation3] sm:$0xff] %vm16, 0.0
      %19 = vst.msk [vmem:[#allocation4] sm:$0xff] %vm16, 0.0
    $region13: #{spectrum_masked_neglogit.1} parent=1 // pred_fallthru
      _
    %v20 = vld [vmem:[%s0] sm:$0xff]
    %v21 = vld [vmem:[%s1] sm:$0xff]
    %v22 = vadd.f32 %v21, 1.0
    %v23 = vadd.f32 %v22, 1e-07
    %v24 = vrcp.pop %v23
    %v25 = vmul.f32 %v22, %v24
    %v26 = vmul.f32 %v20, %v25
    %v27 = vmul.f32 %v21, %v25
    %v28 = vld [vmem:[#allocation2] sm:$0xff]
    %v29 = vmul.f32 %v26, %v26
    %30 = vadd.xlane.f32.xlu0 %v29
    %v31 = vpop.xlane.xlu0 %30
    %v32 = vadd.f32 %v28, %v31
    %vm33 = vcmask 7168
    %34 = vst.msk [vmem:[#allocation2] sm:$0xff] %vm33, %v32
    %v35 = vld [vmem:[#allocation3] sm:$0xff]
    %v36 = vmul.f32 %v27, %v27
    %37 = vadd.xlane.f32.xlu0 %v36
    %v38 = vpop.xlane.xlu0 %37
    %v39 = vadd.f32 %v35, %v38
    %40 = vst.msk [vmem:[#allocation3] sm:$0xff] %vm33, %v39
    %v41 = vld [vmem:[#allocation4] sm:$0xff]
    %v42 = vmul.f32 %v26, %v27
    %43 = vadd.xlane.f32.xlu0 %v42
    %v44 = vpop.xlane.xlu0 %43
    %v45 = vadd.f32 %v41, %v44
    %46 = vst.msk [vmem:[#allocation4] sm:$0xff] %vm33, %v45
    // Predicated region
    $region14: #{spectrum_masked_neglogit.1} parent=1 // pred_check
      %p47 = pneg %p12
    $region15: #{spectrum_masked_neglogit.1} parent=1 // pred_check_branch
      %49 = sbr.rel (%p47) target = $region17
    $region16: #{spectrum_masked_neglogit.1} parent=1 // pred_region
      %v50 = vld [vmem:[#allocation2] sm:$0xff]
      %v51 = vmax.f32 %v50, 1e-07
      %v52 = vrsqrt.pop %v51
      %v53 = vmul.f32 %v51, %v52
      %vm54 = vcmp.eq.f32.partialorder %v51, inf
      %v55 = vsel %vm54, %v51, %v53
      %vm56 = vcmp.eq.f32.partialorder %v51, 0.0
      %v57 = vand.u32 %v51, 2147483648
      %v58 = vsel %vm56, %v57, %v55
      %v59 = vld [vmem:[#allocation3] sm:$0xff]
      %v60 = vmax.f32 %v59, 1e-07
      %v61 = vrsqrt.pop %v60
      %v62 = vmul.f32 %v60, %v61
      %vm63 = vcmp.eq.f32.partialorder %v60, inf
      %v64 = vsel %vm63, %v60, %v62
      %vm65 = vcmp.eq.f32.partialorder %v60, 0.0
      %v66 = vand.u32 %v60, 2147483648
      %v67 = vsel %vm65, %v66, %v64
      %v68 = vmul.f32 %v58, %v67
      %v69 = vld [vmem:[#allocation4] sm:$0xff]
      %v70 = vrcp.pop %v68
      %v71 = vmul.f32 %v69, %v70
      %v72 = vsub.f32 1.0, %v71
      %v73 = vmax.f32 %v72, 1e-07
      %v74 = vlog2.pop %v73
      %v75 = vmul.f32 %v74, 0.6931472
      %v76 = vmax.f32 %v71, 1e-07
      %v77 = vlog2.pop %v76
      %v78 = vmul.f32 %v77, 0.6931472
      %v79 = vsub.f32 %v75, %v78
      %v80 = vsel %vm33, %v79, 0.0
      %v81 = vrot.slane %v80, 4
      %v82 = vadd.f32 %v80, %v81
      %v83 = vrot.slane %v82, 2
      %v84 = vadd.f32 %v82, %v83
      %v85 = vrot.slane %v84, 1
      %v86 = vadd.f32 %v84, %v85
      %v87 = vmul.f32 %v86, 0.125
      %v88 = vsub.f32 %v79, %v87
      %v89 = vmul.f32 %v88, %v88
      %v90 = vsel %vm33, %v89, 0.0
      %v91 = vrot.slane %v90, 4
      %v92 = vadd.f32 %v90, %v91
      %v93 = vrot.slane %v92, 2
      %v94 = vadd.f32 %v92, %v93
      %v95 = vrot.slane %v94, 1
      %v96 = vadd.f32 %v94, %v95
      %v97 = vmul.f32 %v96, 0.14285715
      %v98 = vrsqrt.pop %v97
      %v99 = vmul.f32 %v97, %v98
      %vm100 = vcmp.eq.f32.partialorder %v97, inf
      %v101 = vsel %vm100, %v97, %v99
      %vm102 = vcmp.eq.f32.partialorder %v97, 0.0
      %v103 = vand.u32 %v97, 2147483648
      %v104 = vsel %vm102, %v103, %v101
      %v105 = vmul.f32 %v104, 0.7796968
      %v106 = vmul.f32 %v105, 0.5772157
      %v107 = vsub.f32 %v87, %v106
      %v108 = vmul.f32 %v105, -6.907255
      %v109 = vsub.f32 %v107, %v108
      %vm110 = vcmp.lt.f32.partialorder %v79, %v109
      %v111 = vsel %vm110, %v79, 0.0
      %v112 = vsel %vm33, %v111, 0.0
      %v113 = vrot.slane %v112, 4
      %v114 = vadd.f32 %v112, %v113
      %v115 = vrot.slane %v114, 2
      %v116 = vadd.f32 %v114, %v115
      %v117 = vrot.slane %v116, 1
      %v118 = vadd.f32 %v116, %v117
      %v119 = vadd.f32 %v118, 1e-07
      %v120 = vsel %vm110, 1.0, 0.0
      %v121 = vsel %vm33, %v120, 0.0
      %v122 = vrot.slane %v121, 4
      %v123 = vadd.f32 %v121, %v122
      %v124 = vrot.slane %v123, 2
      %v125 = vadd.f32 %v123, %v124
      %v126 = vrot.slane %v125, 1
      %v127 = vadd.f32 %v125, %v126
      %v128 = vadd.f32 %v127, 1e-07
      %v129 = vrcp.pop %v128
      %v130 = vmul.f32 %v119, %v129
      %vm131 = vcmask 0
      %132 = vst.msk [vmem:[#allocation5] sm:$0x1] %vm131, %v130
    $region17: #{spectrum_masked_neglogit.1} parent=1 // pred_fallthru
      _
    // Predicated region
    $region18: #{spectrum_masked_neglogit.1} parent=1 // pred_check
      _
    $region19: #{spectrum_masked_neglogit.1} parent=1 // pred_check_branch
      %134 = sbr.rel (0) target = $region21
    $region20: #{spectrum_masked_neglogit.1} parent=1 // pred_region
      %s136 = ssub.s32 16, 16
      %137 = vsyncadd [#allocation6], %s136
      %s139 = sshll.u32 [#allocation5], 4
      %s140 = int_to_ptr.vmem [resolvable:$true] %s139
      %142 = dma.vmem_to_hbm [thread:$0]  %s140, 16, %s2, [#allocation6]
    $region21: #{spectrum_masked_neglogit.1} parent=1 // pred_fallthru
      _
    // Predicated region
    $region22: #{spectrum_masked_neglogit.1} parent=1 // pred_check
      _
    $region23: #{spectrum_masked_neglogit.1} parent=1 // pred_check_branch
      %144 = sbr.rel (0) target = $region25
    $region24: #{spectrum_masked_neglogit.1} parent=1 // pred_region
      %145 = dma.done [#allocation6], 16
    $region25: #{spectrum_masked_neglogit.1} parent=1 // pred_fallthru
      _
    %146 = vsyncpa [#allocation6], 1

</llo_original>
